<compile_context>
chip_gen: v6e
topology: v6e:2x2x1
jax: 0.10.0
libtpu: 0.0.40
codegen_flags: <defaults>
</compile_context>

<pallas_src>
import math

import jax
import jax.numpy as jnp
from jax import lax
from jax.experimental import pallas as pl
from jax.experimental.pallas import tpu as pltpu

GROUPS = 32
GN_EPS = 1e-5


# --------------------------------------------------------------------------
# Pass 1: GroupNorm statistics -> fused per-channel scale/shift
# --------------------------------------------------------------------------
def _gn_stats_kernel(x_ref, gsum_ref, bcast_ref, gamma_ref, beta_ref,
                     scale_ref, shift_ref, s1_sc, s2_sc):
    """Grid (N, HW//THW); HW axis is an 'arbitrary' reduction axis.

    x_ref    : (1, THW, C)  streaming tile of x
    gsum_ref : (C, GROUPS)  group-averaging matrix (1/(HW*cg) baked in)
    bcast_ref: (GROUPS, C)  group -> channel broadcast matrix
    gamma/beta: (1, C)
    scale/shift outputs: (1, 1, C), written on the last HW tile.
    """
    t = pl.program_id(1)

    @pl.when(t == 0)
    def _():
        s1_sc[...] = jnp.zeros_like(s1_sc)
        s2_sc[...] = jnp.zeros_like(s2_sc)

    x = x_ref[0]                                            # (THW, C) f32
    s1_sc[...] += jnp.sum(x, axis=0, keepdims=True)          # (1, C)
    s2_sc[...] += jnp.sum(x * x, axis=0, keepdims=True)      # (1, C)

    @pl.when(t == pl.num_programs(1) - 1)
    def _():
        # Per-group mean / E[x^2] via skinny matmuls (no (C,C) matrix needed).
        # NOTE: one-pass E[x^2]-E[x]^2 variance; fine for typical VAE
        # activation scales (a two-pass scheme would need another x sweep).
        mean_g = jnp.dot(s1_sc[...], gsum_ref[...],
                         preferred_element_type=jnp.float32)   # (1, G)
        ex2_g = jnp.dot(s2_sc[...], gsum_ref[...],
                        preferred_element_type=jnp.float32)    # (1, G)
        var_g = ex2_g - mean_g * mean_g
        inv_g = lax.rsqrt(var_g + GN_EPS)                      # (1, G)
        # Broadcast group stats back to channels.
        mean_c = jnp.dot(mean_g, bcast_ref[...],
                         preferred_element_type=jnp.float32)   # (1, C)
        inv_c = jnp.dot(inv_g, bcast_ref[...],
                        preferred_element_type=jnp.float32)    # (1, C)
        g = gamma_ref[...]
        scale_ref[0] = inv_c * g                               # gn = x*scale + shift
        shift_ref[0] = beta_ref[...] - mean_c * inv_c * g


# --------------------------------------------------------------------------
# Pass 2: flash-style attention + residual
# --------------------------------------------------------------------------
def _flash_attn_kernel(xq_ref, xkv_ref, scale_ref, shift_ref,
                       wq_ref, wk_ref, wv_ref, wo_ref,
                       bq_ref, bk_ref, bv_ref, bo_ref,
                       o_ref, q_sc, m_sc, l_sc, acc_sc):
    """Grid (N, HW//TQ, HW//TK); KV axis is the innermost 'arbitrary' axis.

    xq_ref : (1, TQ, C) query-side tile of x (also the residual source)
    xkv_ref: (1, TK, C) key/value-side tile of x
    scale/shift: (1, 1, C) fused GroupNorm affine
    wq/wk/wv/wo: (C, C) bf16 weights (y = x @ W); 1/sqrt(C) folded into wq
    bq/bk/bv/bo: (1, C) f32 biases (1/sqrt(C) folded into bq)
    q_sc  : (TQ, C) bf16 scratch — query projection cached across KV steps
    m/l   : (TQ, 1) f32 online-softmax running max / denom
    acc_sc: (TQ, C) f32 running numerator
    """
    kv = pl.program_id(2)

    @pl.when(kv == 0)
    def _():
        m_sc[...] = jnp.full_like(m_sc, -jnp.inf)
        l_sc[...] = jnp.zeros_like(l_sc)
        acc_sc[...] = jnp.zeros_like(acc_sc)
        gn_q = (xq_ref[0] * scale_ref[0] + shift_ref[0]).astype(jnp.bfloat16)
        q = jnp.dot(gn_q, wq_ref[...],
                    preferred_element_type=jnp.float32) + bq_ref[...]
        q_sc[...] = q.astype(jnp.bfloat16)

    # Normalize + project the current KV tile (bf16 into the MXU, f32 acc).
    gn_kv = (xkv_ref[0] * scale_ref[0] + shift_ref[0]).astype(jnp.bfloat16)
    k = (jnp.dot(gn_kv, wk_ref[...], preferred_element_type=jnp.float32)
         + bk_ref[...]).astype(jnp.bfloat16)                       # (TK, C)
    v = (jnp.dot(gn_kv, wv_ref[...], preferred_element_type=jnp.float32)
         + bv_ref[...]).astype(jnp.bfloat16)                       # (TK, C)

    # scores (already scaled by 1/sqrt(C) via wq); contraction on C, no k.T copy.
    s = lax.dot_general(q_sc[...], k, (((1,), (1,)), ((), ())),
                        preferred_element_type=jnp.float32)        # (TQ, TK)

    m_prev = m_sc[...]
    m_new = jnp.maximum(m_prev, jnp.max(s, axis=-1, keepdims=True))
    alpha = jnp.exp(m_prev - m_new)                                # (TQ, 1)
    p = jnp.exp(s - m_new)                                         # (TQ, TK), unnormalized
    l_sc[...] = alpha * l_sc[...] + jnp.sum(p, axis=-1, keepdims=True)
    acc_sc[...] = alpha * acc_sc[...] + jnp.dot(
        p.astype(jnp.bfloat16), v, preferred_element_type=jnp.float32)
    m_sc[...] = m_new

    @pl.when(kv == pl.num_programs(2) - 1)
    def _():
        inv_l = pl.reciprocal(l_sc[...], approx=True)              # EUP, ~free
        attn = (acc_sc[...] * inv_l).astype(jnp.bfloat16)          # (TQ, C)
        out = jnp.dot(attn, wo_ref[...],
                      preferred_element_type=jnp.float32) + bo_ref[...]
        o_ref[0] = out + xq_ref[0]                                 # residual add


# --------------------------------------------------------------------------
# Wrapper
# --------------------------------------------------------------------------
def _pick_tile(hw, pref):
    for t in (pref, 512, 256, 128, 64, 32, 16, 8):
        if t <= hw and hw % t == 0:
            return t
    return hw


def vae_attention_block(x_nchw, params, *, tq=None, tk=None, stats_tile=None):
    """params: gamma (C,), beta (C,), w_in (3C,C), b_in (3C,), w_out (C,C), b_out (C,)."""
    n, c, h, w = x_nchw.shape
    assert c % GROUPS == 0, "channels must be divisible by 32 for GroupNorm(32, C)"
    hw = h * w
    cg = c // GROUPS

    tq = _pick_tile(hw, tq if tq is not None else 256)
    tk = _pick_tile(hw, tk if tk is not None else 512)
    thw = _pick_tile(hw, stats_tile if stats_tile is not None else 512)

    # NCHW -> (N, HW, C), f32
    x_seq = jnp.transpose(x_nchw.reshape(n, c, hw), (0, 2, 1)).astype(jnp.float32)

    # Skinny group-sum / group-broadcast matrices (replaces the old (C, C) one).
    eye_g = jnp.eye(GROUPS, dtype=jnp.float32)
    gsum = jnp.kron(eye_g, jnp.ones((cg, 1), jnp.float32)) / float(hw * cg)  # (C, G)
    bcast = jnp.kron(eye_g, jnp.ones((1, cg), jnp.float32))                  # (G, C)

    gamma = params["gamma"].reshape(1, c).astype(jnp.float32)
    beta = params["beta"].reshape(1, c).astype(jnp.float32)

    inv_sqrt_c = 1.0 / math.sqrt(c)
    w_in = params["w_in"].astype(jnp.float32)   # (3C, C) torch Linear layout (out, in)
    b_in = params["b_in"].astype(jnp.float32)
    wq = (w_in[0 * c:1 * c].T * inv_sqrt_c).astype(jnp.bfloat16)  # scale folded in
    wk = w_in[1 * c:2 * c].T.astype(jnp.bfloat16)
    wv = w_in[2 * c:3 * c].T.astype(jnp.bfloat16)
    wo = params["w_out"].astype(jnp.float32).T.astype(jnp.bfloat16)
    bq = (b_in[0 * c:1 * c] * inv_sqrt_c).reshape(1, c)
    bk = b_in[1 * c:2 * c].reshape(1, c)
    bv = b_in[2 * c:3 * c].reshape(1, c)
    bo = params["b_out"].astype(jnp.float32).reshape(1, c)

    # ---- pass 1: GroupNorm stats -> fused scale/shift per batch element ----
    scale, shift = pl.pallas_call(
        _gn_stats_kernel,
        out_shape=(jax.ShapeDtypeStruct((n, 1, c), jnp.float32),
                   jax.ShapeDtypeStruct((n, 1, c), jnp.float32)),
        grid_spec=pltpu.PrefetchScalarGridSpec(
            num_scalar_prefetch=0,
            grid=(n, hw // thw),
            in_specs=[
                pl.BlockSpec((1, thw, c), lambda b, t: (b, t, 0)),   # x tile
                pl.BlockSpec((c, GROUPS), lambda b, t: (0, 0)),      # gsum
                pl.BlockSpec((GROUPS, c), lambda b, t: (0, 0)),      # bcast
                pl.BlockSpec((1, c), lambda b, t: (0, 0)),           # gamma
                pl.BlockSpec((1, c), lambda b, t: (0, 0)),           # beta
            ],
            out_specs=(pl.BlockSpec((1, 1, c), lambda b, t: (b, 0, 0)),
                       pl.BlockSpec((1, 1, c), lambda b, t: (b, 0, 0))),
            scratch_shapes=[pltpu.VMEM((1, c), jnp.float32),
                            pltpu.VMEM((1, c), jnp.float32)],
        ),
        compiler_params=pltpu.CompilerParams(
            dimension_semantics=("parallel", "arbitrary")),
    )(x_seq, gsum, bcast, gamma, beta)

    # ---- pass 2: flash attention + residual ----
    out_seq = pl.pallas_call(
        _flash_attn_kernel,
        out_shape=jax.ShapeDtypeStruct((n, hw, c), jnp.float32),
        grid_spec=pltpu.PrefetchScalarGridSpec(
            num_scalar_prefetch=0,
            grid=(n, hw // tq, hw // tk),
            in_specs=[
                pl.BlockSpec((1, tq, c), lambda b, qi, ki: (b, qi, 0)),  # x (query/residual)
                pl.BlockSpec((1, tk, c), lambda b, qi, ki: (b, ki, 0)),  # x (key/value)
                pl.BlockSpec((1, 1, c), lambda b, qi, ki: (b, 0, 0)),    # scale
                pl.BlockSpec((1, 1, c), lambda b, qi, ki: (b, 0, 0)),    # shift
                pl.BlockSpec((c, c), lambda b, qi, ki: (0, 0)),          # wq
                pl.BlockSpec((c, c), lambda b, qi, ki: (0, 0)),          # wk
                pl.BlockSpec((c, c), lambda b, qi, ki: (0, 0)),          # wv
                pl.BlockSpec((c, c), lambda b, qi, ki: (0, 0)),          # wo
                pl.BlockSpec((1, c), lambda b, qi, ki: (0, 0)),          # bq
                pl.BlockSpec((1, c), lambda b, qi, ki: (0, 0)),          # bk
                pl.BlockSpec((1, c), lambda b, qi, ki: (0, 0)),          # bv
                pl.BlockSpec((1, c), lambda b, qi, ki: (0, 0)),          # bo
            ],
            out_specs=pl.BlockSpec((1, tq, c), lambda b, qi, ki: (b, qi, 0)),
            scratch_shapes=[
                pltpu.VMEM((tq, c), jnp.bfloat16),   # cached q tile
                pltpu.VMEM((tq, 1), jnp.float32),    # m (running max)
                pltpu.VMEM((tq, 1), jnp.float32),    # l (running denom)
                pltpu.VMEM((tq, c), jnp.float32),    # acc (running numerator)
            ],
        ),
        compiler_params=pltpu.CompilerParams(
            dimension_semantics=("parallel", "parallel", "arbitrary"),
            vmem_limit_bytes=32 * 1024 * 1024),
    )(x_seq, x_seq, scale, shift, wq, wk, wv, wo, bq, bk, bv, bo)

    # (N, HW, C) -> NCHW
    return jnp.transpose(out_seq, (0, 2, 1)).reshape(n, c, h, w).astype(x_nchw.dtype)


# --------------------------------------------------------------------------
# Pure-JAX reference (mirrors the PyTorch module) and test harness
# --------------------------------------------------------------------------
def _reference_forward(x, params):
    n, c, h, w = x.shape
    cg = c // GROUPS
    xr = x.reshape(n, GROUPS, cg * h * w)
    mean = xr.mean(-1, keepdims=True)
    var = xr.var(-1, keepdims=True)
    xn = (xr - mean) / jnp.sqrt(var + GN_EPS)
    xn = xn.reshape(n, c, h, w)
    xn = xn * params["gamma"].reshape(1, c, 1, 1) + params["beta"].reshape(1, c, 1, 1)
    seq = jnp.transpose(xn.reshape(n, c, h * w), (0, 2, 1))          # (N, HW, C)
    qkv = seq @ params["w_in"].T + params["b_in"]
    q, k, v = jnp.split(qkv, 3, axis=-1)
    wgt = (q @ jnp.swapaxes(k, -1, -2)) / math.sqrt(c)
    wgt = jax.nn.softmax(wgt, axis=-1)
    out = wgt @ v
    out = out @ params["w_out"].T + params["b_out"]
    out = jnp.transpose(out, (0, 2, 1)).reshape(n, c, h, w)
    return out + x


def init_params(key, c):
    ks = jax.random.split(key, 6)
    scale = 0.05
    return {
        "gamma": 1.0 + 0.1 * jax.random.normal(ks[0], (c,), jnp.float32),
        "beta": 0.1 * jax.random.normal(ks[1], (c,), jnp.float32),
        "w_in": scale * jax.random.normal(ks[2], (3 * c, c), jnp.float32),
        "b_in": scale * jax.random.normal(ks[3], (3 * c,), jnp.float32),
        "w_out": scale * jax.random.normal(ks[4], (c, c), jnp.float32),
        "b_out": scale * jax.random.normal(ks[5], (c,), jnp.float32),
    }


if __name__ == "__main__":
    # C must be divisible by 32 (GroupNorm) and is kept a multiple of 128 so
    # the lane dimension stays dense (avoids masked partial stores).
    N, C, H, W = 2, 128, 16, 16          # HW=256 -> 2 query tiles x 2 KV tiles
    key = jax.random.PRNGKey(0)
    kx, kp = jax.random.split(key)
    x = jax.random.normal(kx, (N, C, H, W), jnp.float32)
    params = init_params(kp, C)

    out = vae_attention_block(x, params, tq=128, tk=128)
    out = jax.block_until_ready(out)

    ref = _reference_forward(x, params)
    assert out.shape == (N, C, H, W)
    # bf16 MXU operands -> relaxed tolerance vs the f32 reference.
    assert jnp.allclose(out, ref, atol=3e-2, rtol=3e-2), (
        float(jnp.max(jnp.abs(out - ref))))

    print("KERNEL_OK")
</pallas_src>

<mosaic_0001>
module attributes {stable_mosaic.version = 11 : i64} {
  func.func @_gn_stats_kernel(%arg0: i32, %arg1: i32, %arg2: memref<1x256x128xf32, #tpu.memory_space<vmem>>, %arg3: memref<128x32xf32, #tpu.memory_space<vmem>>, %arg4: memref<32x128xf32, #tpu.memory_space<vmem>>, %arg5: memref<1x128xf32, #tpu.memory_space<vmem>>, %arg6: memref<1x128xf32, #tpu.memory_space<vmem>>, %arg7: memref<1x1x128xf32, #tpu.memory_space<vmem>>, %arg8: memref<1x1x128xf32, #tpu.memory_space<vmem>>, %arg9: memref<1x128xf32, #tpu.memory_space<vmem>>, %arg10: memref<1x128xf32, #tpu.memory_space<vmem>>) attributes {dimension_semantics = [#tpu.dimension_semantics<parallel>, #tpu.dimension_semantics<arbitrary>], iteration_bounds = array<i64: 2, 1>, scalar_prefetch = 0 : i64, scratch_operands = 2 : i64, tpu.core_type = #tpu.core_type<tc>, window_params = [{transform_indices = @transform_0, window_bounds = array<i64: 1, 256, 128>}, {pipeline_mode = #tpu.pipeline_mode<synchronous>, transform_indices = @transform_1, window_bounds = array<i64: 128, 32>}, {pipeline_mode = #tpu.pipeline_mode<synchronous>, transform_indices = @transform_2, window_bounds = array<i64: 32, 128>}, {pipeline_mode = #tpu.pipeline_mode<synchronous>, transform_indices = @transform_3, window_bounds = array<i64: 1, 128>}, {pipeline_mode = #tpu.pipeline_mode<synchronous>, transform_indices = @transform_4, window_bounds = array<i64: 1, 128>}, {transform_indices = @transform_5, window_bounds = array<i64: 1, 1, 128>}, {transform_indices = @transform_6, window_bounds = array<i64: 1, 1, 128>}]} {
    %c0_i32 = arith.constant 0 : i32
    %0 = arith.cmpi eq, %arg1, %c0_i32 : i32
    %1 = arith.extui %0 : i1 to i32
    %c0_i32_0 = arith.constant 0 : i32
    %2 = arith.cmpi ne, %1, %c0_i32_0 : i32
    scf.if %2 {
      %cst_14 = arith.constant 0.000000e+00 : f32
      %19 = vector.broadcast %cst_14 : f32 to vector<1x128xf32>
      %c0_15 = arith.constant 0 : index
      %c0_16 = arith.constant 0 : index
      %20 = vector.load %arg9[%c0_15, %c0_16] : memref<1x128xf32, #tpu.memory_space<vmem>>, vector<1x128xf32>
      tpu.vector_store %arg9[%c0_15, %c0_16], %19 {strides = array<i32>} : memref<1x128xf32, #tpu.memory_space<vmem>>, vector<1x128xf32>,
      %cst_17 = arith.constant 0.000000e+00 : f32
      %21 = vector.broadcast %cst_17 : f32 to vector<1x128xf32>
      %c0_18 = arith.constant 0 : index
      %c0_19 = arith.constant 0 : index
      %22 = vector.load %arg10[%c0_18, %c0_19] : memref<1x128xf32, #tpu.memory_space<vmem>>, vector<1x128xf32>
      tpu.vector_store %arg10[%c0_18, %c0_19], %21 {strides = array<i32>} : memref<1x128xf32, #tpu.memory_space<vmem>>, vector<1x128xf32>,
    } else {
    }
    %c0 = arith.constant 0 : index
    %c0_1 = arith.constant 0 : index
    %c0_2 = arith.constant 0 : index
    %3 = vector.load %arg2[%c0, %c0_1, %c0_2] : memref<1x256x128xf32, #tpu.memory_space<vmem>>, vector<1x256x128xf32>
    %4 = vector.shape_cast %3 : vector<1x256x128xf32> to vector<256x128xf32>
    %c0_3 = arith.constant 0 : index
    %c0_4 = arith.constant 0 : index
    %5 = vector.load %arg9[%c0_3, %c0_4] : memref<1x128xf32, #tpu.memory_space<vmem>>, vector<1x128xf32>
    %cst = arith.constant dense<0.000000e+00> : vector<128xf32>
    %6 = vector.multi_reduction <add>, %4, %cst [0] : vector<256x128xf32> to vector<128xf32>
    %7 = vector.shape_cast %6 : vector<128xf32> to vector<1x128xf32>
    %8 = arith.addf %5, %7 : vector<1x128xf32>
    %c0_5 = arith.constant 0 : index
    %c0_6 = arith.constant 0 : index
    %9 = vector.load %arg9[%c0_5, %c0_6] : memref<1x128xf32, #tpu.memory_space<vmem>>, vector<1x128xf32>
    tpu.vector_store %arg9[%c0_5, %c0_6], %8 {strides = array<i32>} : memref<1x128xf32, #tpu.memory_space<vmem>>, vector<1x128xf32>,
    %c0_7 = arith.constant 0 : index
    %c0_8 = arith.constant 0 : index
    %10 = vector.load %arg10[%c0_7, %c0_8] : memref<1x128xf32, #tpu.memory_space<vmem>>, vector<1x128xf32>
    %11 = arith.mulf %4, %4 : vector<256x128xf32>
    %cst_9 = arith.constant dense<0.000000e+00> : vector<128xf32>
    %12 = vector.multi_reduction <add>, %11, %cst_9 [0] : vector<256x128xf32> to vector<128xf32>
    %13 = vector.shape_cast %12 : vector<128xf32> to vector<1x128xf32>
    %14 = arith.addf %10, %13 : vector<1x128xf32>
    %c0_10 = arith.constant 0 : index
    %c0_11 = arith.constant 0 : index
    %15 = vector.load %arg10[%c0_10, %c0_11] : memref<1x128xf32, #tpu.memory_space<vmem>>, vector<1x128xf32>
    tpu.vector_store %arg10[%c0_10, %c0_11], %14 {strides = array<i32>} : memref<1x128xf32, #tpu.memory_space<vmem>>, vector<1x128xf32>,
    %c0_i32_12 = arith.constant 0 : i32
    %16 = arith.cmpi eq, %arg1, %c0_i32_12 : i32
    %17 = arith.extui %16 : i1 to i32
    %c0_i32_13 = arith.constant 0 : i32
    %18 = arith.cmpi ne, %17, %c0_i32_13 : i32
    scf.if %18 {
      %c0_14 = arith.constant 0 : index
      %c0_15 = arith.constant 0 : index
      %19 = vector.load %arg9[%c0_14, %c0_15] : memref<1x128xf32, #tpu.memory_space<vmem>>, vector<1x128xf32>
      %c0_16 = arith.constant 0 : index
      %c0_17 = arith.constant 0 : index
      %20 = vector.load %arg3[%c0_16, %c0_17] : memref<128x32xf32, #tpu.memory_space<vmem>>, vector<128x32xf32>
      %cst_18 = arith.constant dense<0.000000e+00> : vector<1x32xf32>
      %21 = tpu.matmul %19, %20, %cst_18 {dimension_numbers = #tpu.dot_dimension_numbers<[1], [0], [0], [1], [0, 0, 1, 1], [], []>} : vector<1x128xf32>, vector<128x32xf32>, vector<1x32xf32> -> vector<1x32xf32>
      %c0_19 = arith.constant 0 : index
      %c0_20 = arith.constant 0 : index
      %22 = vector.load %arg10[%c0_19, %c0_20] : memref<1x128xf32, #tpu.memory_space<vmem>>, vector<1x128xf32>
      %c0_21 = arith.constant 0 : index
      %c0_22 = arith.constant 0 : index
      %23 = vector.load %arg3[%c0_21, %c0_22] : memref<128x32xf32, #tpu.memory_space<vmem>>, vector<128x32xf32>
      %cst_23 = arith.constant dense<0.000000e+00> : vector<1x32xf32>
      %24 = tpu.matmul %22, %23, %cst_23 {dimension_numbers = #tpu.dot_dimension_numbers<[1], [0], [0], [1], [0, 0, 1, 1], [], []>} : vector<1x128xf32>, vector<128x32xf32>, vector<1x32xf32> -> vector<1x32xf32>
      %25 = arith.mulf %21, %21 : vector<1x32xf32>
      %26 = arith.subf %24, %25 : vector<1x32xf32>
      %cst_24 = arith.constant 9.99999974E-6 : f32
      %27 = vector.broadcast %cst_24 : f32 to vector<1x32xf32>
      %28 = arith.addf %26, %27 : vector<1x32xf32>
      %29 = math.rsqrt %28 : vector<1x32xf32>
      %c0_25 = arith.constant 0 : index
      %c0_26 = arith.constant 0 : index
      %30 = vector.load %arg4[%c0_25, %c0_26] : memref<32x128xf32, #tpu.memory_space<vmem>>, vector<32x128xf32>
      %cst_27 = arith.constant dense<0.000000e+00> : vector<1x128xf32>
      %31 = tpu.matmul %21, %30, %cst_27 {dimension_numbers = #tpu.dot_dimension_numbers<[1], [0], [0], [1], [0, 0, 1, 1], [], []>} : vector<1x32xf32>, vector<32x128xf32>, vector<1x128xf32> -> vector<1x128xf32>
      %c0_28 = arith.constant 0 : index
      %c0_29 = arith.constant 0 : index
      %32 = vector.load %arg4[%c0_28, %c0_29] : memref<32x128xf32, #tpu.memory_space<vmem>>, vector<32x128xf32>
      %cst_30 = arith.constant dense<0.000000e+00> : vector<1x128xf32>
      %33 = tpu.matmul %29, %32, %cst_30 {dimension_numbers = #tpu.dot_dimension_numbers<[1], [0], [0], [1], [0, 0, 1, 1], [], []>} : vector<1x32xf32>, vector<32x128xf32>, vector<1x128xf32> -> vector<1x128xf32>
      %c0_31 = arith.constant 0 : index
      %c0_32 = arith.constant 0 : index
      %34 = vector.load %arg5[%c0_31, %c0_32] : memref<1x128xf32, #tpu.memory_space<vmem>>, vector<1x128xf32>
      %35 = arith.mulf %33, %34 : vector<1x128xf32>
      %c0_33 = arith.constant 0 : index
      %c0_34 = arith.constant 0 : index
      %c0_35 = arith.constant 0 : index
      %36 = vector.load %arg7[%c0_33, %c0_34, %c0_35] : memref<1x1x128xf32, #tpu.memory_space<vmem>>, vector<1x1x128xf32>
      %37 = vector.shape_cast %36 : vector<1x1x128xf32> to vector<1x128xf32>
      %38 = vector.shape_cast %35 : vector<1x128xf32> to vector<1x1x128xf32>
      tpu.vector_store %arg7[%c0_33, %c0_34, %c0_35], %38 {strides = array<i32>} : memref<1x1x128xf32, #tpu.memory_space<vmem>>, vector<1x1x128xf32>,
      %c0_36 = arith.constant 0 : index
      %c0_37 = arith.constant 0 : index
      %39 = vector.load %arg6[%c0_36, %c0_37] : memref<1x128xf32, #tpu.memory_space<vmem>>, vector<1x128xf32>
      %40 = arith.mulf %31, %33 : vector<1x128xf32>
      %41 = arith.mulf %40, %34 : vector<1x128xf32>
      %42 = arith.subf %39, %41 : vector<1x128xf32>
      %c0_38 = arith.constant 0 : index
      %c0_39 = arith.constant 0 : index
      %c0_40 = arith.constant 0 : index
      %43 = vector.load %arg8[%c0_38, %c0_39, %c0_40] : memref<1x1x128xf32, #tpu.memory_space<vmem>>, vector<1x1x128xf32>
      %44 = vector.shape_cast %43 : vector<1x1x128xf32> to vector<1x128xf32>
      %45 = vector.shape_cast %42 : vector<1x128xf32> to vector<1x1x128xf32>
      tpu.vector_store %arg8[%c0_38, %c0_39, %c0_40], %45 {strides = array<i32>} : memref<1x1x128xf32, #tpu.memory_space<vmem>>, vector<1x1x128xf32>,
    } else {
    }
    return
  }
  func.func @transform_0(%arg0: i32, %arg1: i32) -> (i32, i32, i32) {
    %c0_i32 = arith.constant 0 : i32
    %c0_i32_0 = arith.constant 0 : i32
    return %arg0, %arg1, %c0_i32 : i32, i32, i32
  }
  func.func @transform_1(%arg0: i32, %arg1: i32) -> (i32, i32) {
    %c0_i32 = arith.constant 0 : i32
    %c0_i32_0 = arith.constant 0 : i32
    %c0_i32_1 = arith.constant 0 : i32
    return %c0_i32, %c0_i32_0 : i32, i32
  }
  func.func @transform_2(%arg0: i32, %arg1: i32) -> (i32, i32) {
    %c0_i32 = arith.constant 0 : i32
    %c0_i32_0 = arith.constant 0 : i32
    %c0_i32_1 = arith.constant 0 : i32
    return %c0_i32, %c0_i32_0 : i32, i32
  }
  func.func @transform_3(%arg0: i32, %arg1: i32) -> (i32, i32) {
    %c0_i32 = arith.constant 0 : i32
    %c0_i32_0 = arith.constant 0 : i32
    %c0_i32_1 = arith.constant 0 : i32
    return %c0_i32, %c0_i32_0 : i32, i32
  }
  func.func @transform_4(%arg0: i32, %arg1: i32) -> (i32, i32) {
    %c0_i32 = arith.constant 0 : i32
    %c0_i32_0 = arith.constant 0 : i32
    %c0_i32_1 = arith.constant 0 : i32
    return %c0_i32, %c0_i32_0 : i32, i32
  }
  func.func @transform_5(%arg0: i32, %arg1: i32) -> (i32, i32, i32) {
    %c0_i32 = arith.constant 0 : i32
    %c0_i32_0 = arith.constant 0 : i32
    %c0_i32_1 = arith.constant 0 : i32
    return %arg0, %c0_i32, %c0_i32_0 : i32, i32, i32
  }
  func.func @transform_6(%arg0: i32, %arg1: i32) -> (i32, i32, i32) {
    %c0_i32 = arith.constant 0 : i32
    %c0_i32_0 = arith.constant 0 : i32
    %c0_i32_1 = arith.constant 0 : i32
    return %arg0, %c0_i32, %c0_i32_0 : i32, i32, i32
  }
}

</mosaic_0001>

<llo_original>
// kernel: tpu_custom_call.1
$region0: #{tpu_custom_call.1}
  #allocation0 [shape = 'u32[]', space=smem, size = 0x4, offset = 0x4, fixed_abs, tag = 'smem constant byte address 0x4 - core index']
  #allocation1 [shape = 'u32[144,128]{1,0:T(1,128)}', space=vmem, size = 0x12000, scoped, tag = 'internal scratch']
  #allocation2 [shape = 'f32[1,128]{1,0:T(1,128)}', space=vmem, size = 0x200, scoped, tag = 'scratch operand']
  #allocation3 [shape = 'f32[1,128]{1,0:T(1,128)}', space=vmem, size = 0x200, scoped, tag = 'scratch operand']
  %s0 = inlined_call_operand.hbm [shape: f32[2,256,128], index: 0, kind: input, shape index: {}]
  %s1 = inlined_call_operand.vmem [shape: f32[128,32], index: 1, kind: input, shape index: {}]
  %s2 = inlined_call_operand.vmem [shape: f32[32,128], index: 2, kind: input, shape index: {}]
  %s3 = inlined_call_operand.vmem [shape: f32[1,128], index: 3, kind: input, shape index: {}]
  %s4 = inlined_call_operand.vmem [shape: f32[1,128], index: 4, kind: input, shape index: {}]
  %s5 = inlined_call_operand.hbm [shape: f32[2,1,128], index: 5, kind: output, shape index: {0}]
  %s6 = inlined_call_operand.hbm [shape: f32[2,1,128], index: 6, kind: output, shape index: {1}]
  %7 = xla_tuple %s5, %s6
  %s8 = sld [smem:[#allocation0]]
  $region73: #{tpu_custom_call.1} parent=0
    _
  %s10 = ssub.s32 1, %s8
  %s11 = scalar_select 0, %s10, %s8
  $region1: #{tpu_custom_call.1} parent=0
    #allocation4 [shape = 'u8[262144]{0}', space=vmem, size = 0x40000, scoped, tag = 'input window, operand 0']
    #allocation5 [shape = 's32[2]{0}', space=sflag, size = 0x8, scoped, tag = 'scoped memory for tpu_custom_call.1']
    #allocation6 [shape = 's32[2]{0}', space=sflag, size = 0x8, scoped, tag = 'scoped memory for tpu_custom_call.1']
    #allocation7 [shape = 'u8[1024]{0}', space=vmem, size = 0x400, scoped, tag = 'output window, operand 0']
    #allocation8 [shape = 'u8[1024]{0}', space=vmem, size = 0x400, scoped, tag = 'output window, operand 1']
    #allocation9 [shape = 's32[2]{0}', space=sflag, size = 0x8, scoped, tag = 'scoped memory for tpu_custom_call.1']
    %12 = vsyncpa [#allocation5], 0
    %s13 = scalar_lea.sflag [#allocation5], 1
    %14 = vsyncpa %s13, 0
    %15 = vsyncpa [#allocation6], 0
    %s16 = scalar_lea.sflag [#allocation6], 1
    %17 = vsyncpa %s16, 0
    %18 = vsyncpa [#allocation9], 0
    %s19 = scalar_lea.sflag [#allocation9], 1
    %20 = vsyncpa %s19, 0
    loop: start=0, step=1, limit=4
    $region2: #{tpu_custom_call.1} parent=1 // loop_pre_header
      _
    $region3: #{tpu_custom_call.1} parent=1 // loop_header
      %s22 = sphi 0, %s26
      %p23 = scmp.ge.s32.totalorder %s22, 4
      %s29 = sphi 0, %s41
      %s30 = sphi 0, %s37
      %s31 = sphi 0, %s29
      %s32 = sphi 0, %s30
      %s33 = sphi 0, %s31
      %s34 = sphi 0, %s32
      %s46 = sphi 0, %s48
      %s49 = sphi 0, %s46
      %s50 = sphi 0, %s49
      %s66 = sphi 0, %s50
      %s70 = sphi 0, %s70
      %s72 = sphi 0, %s70
      %s73 = sphi 0, %s72
      %s87 = sphi 0, %s73
      %s91 = sphi 0, %s91
      %s93 = sphi 0, %s91
      %s94 = sphi 0, %s93
      %s108 = sphi 0, %s94
      %s112 = sphi 0, %s112
      %s114 = sphi 0, %s112
      %s115 = sphi 0, %s114
      %s129 = sphi 0, %s115
      %s133 = sphi 0, %s133
      %s135 = sphi 0, %s133
      %s136 = sphi 0, %s135
      %s150 = sphi 0, %s136
      %s156 = sphi 0, %s158
      %s159 = sphi 0, %s156
      %s160 = sphi 0, %s159
      %s176 = sphi 0, %s160
      %s182 = sphi 0, %s184
      %s185 = sphi 0, %s182
      %s186 = sphi 0, %s185
      %s202 = sphi 0, %s186
    $region4: #{tpu_custom_call.1} parent=1 // loop_header_branch
      %25 = sbr.rel (%p23) target = $region8
    $region5: #{tpu_custom_call.1} parent=1 // loop_body
      %s27 = ssub.s32 %s22, 1
      %s28 = ssub.s32 %s22, 2
      %s35 = sadd.s32 1, %s30
      %p36 = scmp.ge.s32.totalorder %s35, 1
      %s37 = scalar_select %p36, 0, %s35
      %s38 = sadd.s32 1, %s29
      %s39 = scalar_select %p36, %s38, %s29
      %p40 = scmp.ge.s32.totalorder %s39, 2
      %s41 = scalar_select %p40, 0, %s39
      %s42 = ssub.s32 %s29, %s41
      %s43 = ssub.s32 %s30, %s37
      %s44 = sor.u32 %s42, %s43
      %p45 = scmp.eq.s32.totalorder %s44, 0
      %s47 = sadd.s32 %s46, 1
      %s48 = scalar_select %p45, %s46, %s47
      %p51 = pneg %p45
      %p52 = scmp.eq.s32.totalorder %s22, 1
      %p53 = por %p51, %p52
      %p54 = scmp.ne.s32.totalorder %s46, %s49
      %p55 = scmp.eq.s32.totalorder %s22, 0
      %p56 = por %p54, %p55
      %p57 = scmp.ne.s32.totalorder %s46, %s49
      %p58 = scmp.eq.s32.totalorder %s27, 1
      %p59 = por %p57, %p58
      %p60 = scmp.ne.s32.totalorder %s49, %s50
      %p61 = scmp.eq.s32.totalorder %s27, 0
      %p62 = por %p60, %p61
      %p63 = scmp.ne.s32.totalorder %s49, %s50
      %p64 = scmp.eq.s32.totalorder %s28, 1
      %p65 = por %p63, %p64
      %p67 = scmp.ne.s32.totalorder %s50, %s66
      %p68 = scmp.eq.s32.totalorder %s28, 0
      %p69 = por %p67, %p68
      %s71 = sadd.s32 %s70, 1
      %p74 = scmp.eq.s32.totalorder %s22, 1
      %p75 = scmp.ne.s32.totalorder %s70, %s72
      %p76 = scmp.eq.s32.totalorder %s22, 0
      %p77 = por %p75, %p76
      %p78 = scmp.ne.s32.totalorder %s70, %s72
      %p79 = scmp.eq.s32.totalorder %s27, 1
      %p80 = por %p78, %p79
      %p81 = scmp.ne.s32.totalorder %s72, %s73
      %p82 = scmp.eq.s32.totalorder %s27, 0
      %p83 = por %p81, %p82
      %p84 = scmp.ne.s32.totalorder %s72, %s73
      %p85 = scmp.eq.s32.totalorder %s28, 1
      %p86 = por %p84, %p85
      %p88 = scmp.ne.s32.totalorder %s73, %s87
      %p89 = scmp.eq.s32.totalorder %s28, 0
      %p90 = por %p88, %p89
      %s92 = sadd.s32 %s91, 1
      %p95 = scmp.eq.s32.totalorder %s22, 1
      %p96 = scmp.ne.s32.totalorder %s91, %s93
      %p97 = scmp.eq.s32.totalorder %s22, 0
      %p98 = por %p96, %p97
      %p99 = scmp.ne.s32.totalorder %s91, %s93
      %p100 = scmp.eq.s32.totalorder %s27, 1
      %p101 = por %p99, %p100
      %p102 = scmp.ne.s32.totalorder %s93, %s94
      %p103 = scmp.eq.s32.totalorder %s27, 0
      %p104 = por %p102, %p103
      %p105 = scmp.ne.s32.totalorder %s93, %s94
      %p106 = scmp.eq.s32.totalorder %s28, 1
      %p107 = por %p105, %p106
      %p109 = scmp.ne.s32.totalorder %s94, %s108
      %p110 = scmp.eq.s32.totalorder %s28, 0
      %p111 = por %p109, %p110
      %s113 = sadd.s32 %s112, 1
      %p116 = scmp.eq.s32.totalorder %s22, 1
      %p117 = scmp.ne.s32.totalorder %s112, %s114
      %p118 = scmp.eq.s32.totalorder %s22, 0
      %p119 = por %p117, %p118
      %p120 = scmp.ne.s32.totalorder %s112, %s114
      %p121 = scmp.eq.s32.totalorder %s27, 1
      %p122 = por %p120, %p121
      %p123 = scmp.ne.s32.totalorder %s114, %s115
      %p124 = scmp.eq.s32.totalorder %s27, 0
      %p125 = por %p123, %p124
      %p126 = scmp.ne.s32.totalorder %s114, %s115
      %p127 = scmp.eq.s32.totalorder %s28, 1
      %p128 = por %p126, %p127
      %p130 = scmp.ne.s32.totalorder %s115, %s129
      %p131 = scmp.eq.s32.totalorder %s28, 0
      %p132 = por %p130, %p131
      %s134 = sadd.s32 %s133, 1
      %p137 = scmp.eq.s32.totalorder %s22, 1
      %p138 = scmp.ne.s32.totalorder %s133, %s135
      %p139 = scmp.eq.s32.totalorder %s22, 0
      %p140 = por %p138, %p139
      %p141 = scmp.ne.s32.totalorder %s133, %s135
      %p142 = scmp.eq.s32.totalorder %s27, 1
      %p143 = por %p141, %p142
      %p144 = scmp.ne.s32.totalorder %s135, %s136
      %p145 = scmp.eq.s32.totalorder %s27, 0
      %p146 = por %p144, %p145
      %p147 = scmp.ne.s32.totalorder %s135, %s136
      %p148 = scmp.eq.s32.totalorder %s28, 1
      %p149 = por %p147, %p148
      %p151 = scmp.ne.s32.totalorder %s136, %s150
      %p152 = scmp.eq.s32.totalorder %s28, 0
      %p153 = por %p151, %p152
      %s154 = ssub.s32 %s29, %s41
      %p155 = scmp.eq.s32.totalorder %s154, 0
      %s157 = sadd.s32 %s156, 1
      %s158 = scalar_select %p155, %s156, %s157
      %p161 = pneg %p155
      %p162 = scmp.eq.s32.totalorder %s22, 1
      %p163 = por %p161, %p162
      %p164 = scmp.ne.s32.totalorder %s156, %s159
      %p165 = scmp.eq.s32.totalorder %s22, 0
      %p166 = por %p164, %p165
      %p167 = scmp.ne.s32.totalorder %s156, %s159
      %p168 = scmp.eq.s32.totalorder %s27, 1
      %p169 = por %p167, %p168
      %p170 = scmp.ne.s32.totalorder %s159, %s160
      %p171 = scmp.eq.s32.totalorder %s27, 0
      %p172 = por %p170, %p171
      %p173 = scmp.ne.s32.totalorder %s159, %s160
      %p174 = scmp.eq.s32.totalorder %s28, 1
      %p175 = por %p173, %p174
      %p177 = scmp.ne.s32.totalorder %s160, %s176
      %p178 = scmp.eq.s32.totalorder %s28, 0
      %p179 = por %p177, %p178
      %s180 = ssub.s32 %s29, %s41
      %p181 = scmp.eq.s32.totalorder %s180, 0
      %s183 = sadd.s32 %s182, 1
      %s184 = scalar_select %p181, %s182, %s183
      %p187 = pneg %p181
      %p188 = scmp.eq.s32.totalorder %s22, 1
      %p189 = por %p187, %p188
      %p190 = scmp.ne.s32.totalorder %s182, %s185
      %p191 = scmp.eq.s32.totalorder %s22, 0
      %p192 = por %p190, %p191
      %p193 = scmp.ne.s32.totalorder %s182, %s185
      %p194 = scmp.eq.s32.totalorder %s27, 1
      %p195 = por %p193, %p194
      %p196 = scmp.ne.s32.totalorder %s185, %s186
      %p197 = scmp.eq.s32.totalorder %s27, 0
      %p198 = por %p196, %p197
      %p199 = scmp.ne.s32.totalorder %s185, %s186
      %p200 = scmp.eq.s32.totalorder %s28, 1
      %p201 = por %p199, %p200
      %p203 = scmp.ne.s32.totalorder %s186, %s202
      %p204 = scmp.eq.s32.totalorder %s28, 0
      %p205 = por %p203, %p204
      %p206 = scmp.le.s32.totalorder 1, %s22
      %p207 = scmp.lt.s32.totalorder %s22, 3
      %p208 = pnand %p206, %p207
      %p209 = pneg %p208
      // Predicated region
      $region9: #{tpu_custom_call.1} parent=5 // pred_check
        _
      $region10: #{tpu_custom_call.1} parent=5 // pred_check_branch
        %211 = sbr.rel (%p208) target = $region12
      $region11: #{tpu_custom_call.1} parent=5 // pred_region
        %s212 = ssub.s32 %s22, 1
        // Predicated region
        $region13: #{tpu_custom_call.1} parent=11 // pred_check
          %p213 = pneg %p83
        $region14: #{tpu_custom_call.1} parent=11 // pred_check_branch
          %215 = sbr.rel (%p213) target = $region16
        $region15: #{tpu_custom_call.1} parent=11 // pred_region
          _
        $region16: #{tpu_custom_call.1} parent=11 // pred_fallthru
          _
        // Predicated region
        $region17: #{tpu_custom_call.1} parent=11 // pred_check
          %p216 = pneg %p104
        $region18: #{tpu_custom_call.1} parent=11 // pred_check_branch
          %218 = sbr.rel (%p216) target = $region20
        $region19: #{tpu_custom_call.1} parent=11 // pred_region
          _
        $region20: #{tpu_custom_call.1} parent=11 // pred_fallthru
          _
        // Predicated region
        $region21: #{tpu_custom_call.1} parent=11 // pred_check
          %p219 = pneg %p125
        $region22: #{tpu_custom_call.1} parent=11 // pred_check_branch
          %221 = sbr.rel (%p219) target = $region24
        $region23: #{tpu_custom_call.1} parent=11 // pred_region
          _
        $region24: #{tpu_custom_call.1} parent=11 // pred_fallthru
          _
        // Predicated region
        $region25: #{tpu_custom_call.1} parent=11 // pred_check
          %p222 = pneg %p146
        $region26: #{tpu_custom_call.1} parent=11 // pred_check_branch
          %224 = sbr.rel (%p222) target = $region28
        $region27: #{tpu_custom_call.1} parent=11 // pred_region
          _
        $region28: #{tpu_custom_call.1} parent=11 // pred_fallthru
          _
      $region12: #{tpu_custom_call.1} parent=5 // pred_fallthru
        _
      %p225 = scmp.lt.s32.totalorder %s22, 2
      // Predicated region
      $region29: #{tpu_custom_call.1} parent=5 // pred_check
        %p226 = pneg %p225
      $region30: #{tpu_custom_call.1} parent=5 // pred_check_branch
        %228 = sbr.rel (%p226) target = $region32
      $region31: #{tpu_custom_call.1} parent=5 // pred_region
        // Predicated region
        $region33: #{tpu_custom_call.1} parent=31 // pred_check
          %p229 = pneg %p56
        $region34: #{tpu_custom_call.1} parent=31 // pred_check_branch
          %231 = sbr.rel (%p229) target = $region36
        $region35: #{tpu_custom_call.1} parent=31 // pred_region
          %s232 = sand.u32 %s46, 1
          %s233 = scalar_lea.sflag [#allocation5], %s232
          %s234 = sand.u32 %s46, 1
          %s235 = smul.addr %s234, 256
          %s236 = scalar_lea.vmem [#allocation4], %s235
          %s237 = smul.u32 32, %s30
          %s239 = ssub.s32 4096, 4096
          %240 = vsyncadd %s233, %s239
          %s241 = smul.addr %s29, 32
          %s242 = sadd.s32 %s237, %s241
          %s243 = smul.addr %s242, 128
          %s244 = scalar_lea.hbm %s0, %s243
          %s245 = sshll.u32 %s236, 4
          %s246 = int_to_ptr.vmem [resolvable:$true] %s245
          %251 = dma.hbm_to_vmem [thread:$0]  %s244, 4096, %s246, %s233, 128, 128, 8
        $region36: #{tpu_custom_call.1} parent=31 // pred_fallthru
          _
      $region32: #{tpu_custom_call.1} parent=5 // pred_fallthru
        _
      %p252 = scmp.le.s32.totalorder 1, %s22
      %p253 = scmp.lt.s32.totalorder %s22, 3
      %p254 = pnand %p252, %p253
      %p255 = pneg %p254
      // Predicated region
      $region37: #{tpu_custom_call.1} parent=5 // pred_check
        _
      $region38: #{tpu_custom_call.1} parent=5 // pred_check_branch
        %257 = sbr.rel (%p254) target = $region40
      $region39: #{tpu_custom_call.1} parent=5 // pred_region
        %s258 = ssub.s32 %s22, 1
        %s259 = sand.u32 %s49, 1
        %s260 = scalar_lea.sflag [#allocation5], %s259
        %s261 = sand.u32 %s49, 1
        %s262 = smul.addr %s261, 256
        %s263 = scalar_lea.vmem [#allocation4], %s262
        // Predicated region
        $region41: #{tpu_custom_call.1} parent=39 // pred_check
          %p264 = pneg %p62
        $region42: #{tpu_custom_call.1} parent=39 // pred_check_branch
          %266 = sbr.rel (%p264) target = $region44
        $region43: #{tpu_custom_call.1} parent=39 // pred_region
          %267 = dma.done %s260, 4096
        $region44: #{tpu_custom_call.1} parent=39 // pred_fallthru
          _
        %s268 = sand.u32 %s49, 1
        %s269 = scalar_lea.sflag [#allocation5], %s268
        %s270 = sand.u32 %s49, 1
        %s271 = smul.addr %s270, 256
        %s272 = scalar_lea.vmem [#allocation4], %s271
        %p273 = pneg %p62
        %p274 = pneg %p59
        %p275 = pneg %p83
        %p276 = pneg %p80
        %p277 = pneg %p104
        %p278 = pneg %p101
        %p279 = pneg %p125
        %p280 = pneg %p122
        %p281 = pneg %p146
        %p282 = pneg %p143
        %p283 = pneg %p172
        %p284 = pneg %p169
        %s285 = sand.u32 %s159, 1
        %s286 = scalar_lea.sflag [#allocation6], %s285
        %s287 = sand.u32 %s159, 1
        %s288 = scalar_lea.vmem [#allocation7], %s287
        %p289 = pneg %p198
        %p290 = pneg %p195
        %s291 = sand.u32 %s185, 1
        %s292 = scalar_lea.sflag [#allocation9], %s291
        %s293 = sand.u32 %s185, 1
        %s294 = scalar_lea.vmem [#allocation8], %s293
        %s295 = smul.u32 32, %s32
        %p296 = scmp.eq.s32.totalorder %s32, 0
        // Predicated region
        $region45: #{tpu_custom_call.1} parent=39 // pred_check
          %p297 = pneg %p296
        $region46: #{tpu_custom_call.1} parent=39 // pred_check_branch
          %299 = sbr.rel (%p297) target = $region48
        $region47: #{tpu_custom_call.1} parent=39 // pred_region
          %300 = vst [vmem:[#allocation2] sm:$0x1] 0.0
          %301 = vst [vmem:[#allocation3] sm:$0x1] 0.0
        $region48: #{tpu_custom_call.1} parent=39 // pred_fallthru
          _
        %v302 = vld [vmem:[%s263] sm:$0xff]
        %v303 = vld [vmem:[%s263 + $0x8] sm:$0xff]
        %v304 = vld [vmem:[%s263 + $0x10] sm:$0xff]
        %v305 = vld [vmem:[%s263 + $0x18] sm:$0xff]
        %v306 = vld [vmem:[%s263 + $0x20] sm:$0xff]
        %v307 = vld [vmem:[%s263 + $0x28] sm:$0xff]
        %v308 = vld [vmem:[%s263 + $0x30] sm:$0xff]
        %v309 = vld [vmem:[%s263 + $0x38] sm:$0xff]
        %v310 = vld [vmem:[%s263 + $0x40] sm:$0xff]
        %v311 = vld [vmem:[%s263 + $0x48] sm:$0xff]
        %v312 = vld [vmem:[%s263 + $0x50] sm:$0xff]
        %v313 = vld [vmem:[%s263 + $0x58] sm:$0xff]
        %v314 = vld [vmem:[%s263 + $0x60] sm:$0xff]
        %v315 = vld [vmem:[%s263 + $0x68] sm:$0xff]
        %v316 = vld [vmem:[%s263 + $0x70] sm:$0xff]
        %v317 = vld [vmem:[%s263 + $0x78] sm:$0xff]
        %v318 = vld [vmem:[%s263 + $0x80] sm:$0xff]
        %v319 = vld [vmem:[%s263 + $0x88] sm:$0xff]
        %v320 = vld [vmem:[%s263 + $0x90] sm:$0xff]
        %v321 = vld [vmem:[%s263 + $0x98] sm:$0xff]
        %v322 = vld [vmem:[%s263 + $0xa0] sm:$0xff]
        %v323 = vld [vmem:[%s263 + $0xa8] sm:$0xff]
        %v324 = vld [vmem:[%s263 + $0xb0] sm:$0xff]
        %v325 = vld [vmem:[%s263 + $0xb8] sm:$0xff]
        %v326 = vld [vmem:[%s263 + $0xc0] sm:$0xff]
        %v327 = vld [vmem:[%s263 + $0xc8] sm:$0xff]
        %v328 = vld [vmem:[%s263 + $0xd0] sm:$0xff]
        %v329 = vld [vmem:[%s263 + $0xd8] sm:$0xff]
        %v330 = vld [vmem:[%s263 + $0xe0] sm:$0xff]
        %v331 = vld [vmem:[%s263 + $0xe8] sm:$0xff]
        %v332 = vld [vmem:[%s263 + $0xf0] sm:$0xff]
        %v333 = vld [vmem:[%s263 + $0xf8] sm:$0xff]
        %v334 = vld [vmem:[#allocation2] sm:$0x1]
        %v335 = vadd.f32 %v302, %v303
        %v336 = vadd.f32 %v335, %v304
        %v337 = vadd.f32 %v336, %v305
        %v338 = vadd.f32 %v337, %v306
        %v339 = vadd.f32 %v338, %v307
        %v340 = vadd.f32 %v339, %v308
        %v341 = vadd.f32 %v340, %v309
        %v342 = vadd.f32 %v341, %v310
        %v343 = vadd.f32 %v342, %v311
        %v344 = vadd.f32 %v343, %v312
        %v345 = vadd.f32 %v344, %v313
        %v346 = vadd.f32 %v345, %v314
        %v347 = vadd.f32 %v346, %v315
        %v348 = vadd.f32 %v347, %v316
        %v349 = vadd.f32 %v348, %v317
        %v350 = vadd.f32 %v349, %v318
        %v351 = vadd.f32 %v350, %v319
        %v352 = vadd.f32 %v351, %v320
        %v353 = vadd.f32 %v352, %v321
        %v354 = vadd.f32 %v353, %v322
        %v355 = vadd.f32 %v354, %v323
        %v356 = vadd.f32 %v355, %v324
        %v357 = vadd.f32 %v356, %v325
        %v358 = vadd.f32 %v357, %v326
        %v359 = vadd.f32 %v358, %v327
        %v360 = vadd.f32 %v359, %v328
        %v361 = vadd.f32 %v360, %v329
        %v362 = vadd.f32 %v361, %v330
        %v363 = vadd.f32 %v362, %v331
        %v364 = vadd.f32 %v363, %v332
        %v365 = vadd.f32 %v364, %v333
        %v366 = vrot.slane %v365, 4
        %v367 = vadd.f32 %v365, %v366
        %v368 = vrot.slane %v367, 2
        %v369 = vadd.f32 %v367, %v368
        %v370 = vrot.slane %v369, 1
        %v371 = vadd.f32 %v369, %v370
        %v372 = vadd.f32 %v334, %v371
        %373 = vst [vmem:[#allocation2] sm:$0x1] %v372
        %v374 = vld [vmem:[#allocation3] sm:$0x1]
        %v375 = vmul.f32 %v302, %v302
        %v376 = vmul.f32 %v303, %v303
        %v377 = vmul.f32 %v304, %v304
        %v378 = vmul.f32 %v305, %v305
        %v379 = vmul.f32 %v306, %v306
        %v380 = vmul.f32 %v307, %v307
        %v381 = vmul.f32 %v308, %v308
        %v382 = vmul.f32 %v309, %v309
        %v383 = vmul.f32 %v310, %v310
        %v384 = vmul.f32 %v311, %v311
        %v385 = vmul.f32 %v312, %v312
        %v386 = vmul.f32 %v313, %v313
        %v387 = vmul.f32 %v314, %v314
        %v388 = vmul.f32 %v315, %v315
        %v389 = vmul.f32 %v316, %v316
        %v390 = vmul.f32 %v317, %v317
        %v391 = vmul.f32 %v318, %v318
        %v392 = vmul.f32 %v319, %v319
        %v393 = vmul.f32 %v320, %v320
        %v394 = vmul.f32 %v321, %v321
        %v395 = vmul.f32 %v322, %v322
        %v396 = vmul.f32 %v323, %v323
        %v397 = vmul.f32 %v324, %v324
        %v398 = vmul.f32 %v325, %v325
        %v399 = vmul.f32 %v326, %v326
        %v400 = vmul.f32 %v327, %v327
        %v401 = vmul.f32 %v328, %v328
        %v402 = vmul.f32 %v329, %v329
        %v403 = vmul.f32 %v330, %v330
        %v404 = vmul.f32 %v331, %v331
        %v405 = vmul.f32 %v332, %v332
        %v406 = vmul.f32 %v333, %v333
        %v407 = vadd.f32 %v375, %v376
        %v408 = vadd.f32 %v407, %v377
        %v409 = vadd.f32 %v408, %v378
        %v410 = vadd.f32 %v409, %v379
        %v411 = vadd.f32 %v410, %v380
        %v412 = vadd.f32 %v411, %v381
        %v413 = vadd.f32 %v412, %v382
        %v414 = vadd.f32 %v413, %v383
        %v415 = vadd.f32 %v414, %v384
        %v416 = vadd.f32 %v415, %v385
        %v417 = vadd.f32 %v416, %v386
        %v418 = vadd.f32 %v417, %v387
        %v419 = vadd.f32 %v418, %v388
        %v420 = vadd.f32 %v419, %v389
        %v421 = vadd.f32 %v420, %v390
        %v422 = vadd.f32 %v421, %v391
        %v423 = vadd.f32 %v422, %v392
        %v424 = vadd.f32 %v423, %v393
        %v425 = vadd.f32 %v424, %v394
        %v426 = vadd.f32 %v425, %v395
        %v427 = vadd.f32 %v426, %v396
        %v428 = vadd.f32 %v427, %v397
        %v429 = vadd.f32 %v428, %v398
        %v430 = vadd.f32 %v429, %v399
        %v431 = vadd.f32 %v430, %v400
        %v432 = vadd.f32 %v431, %v401
        %v433 = vadd.f32 %v432, %v402
        %v434 = vadd.f32 %v433, %v403
        %v435 = vadd.f32 %v434, %v404
        %v436 = vadd.f32 %v435, %v405
        %v437 = vadd.f32 %v436, %v406
        %v438 = vrot.slane %v437, 4
        %v439 = vadd.f32 %v437, %v438
        %v440 = vrot.slane %v439, 2
        %v441 = vadd.f32 %v439, %v440
        %v442 = vrot.slane %v441, 1
        %v443 = vadd.f32 %v441, %v442
        %v444 = vadd.f32 %v374, %v443
        %445 = vst [vmem:[#allocation3] sm:$0x1] %v444
        // Predicated region
        $region49: #{tpu_custom_call.1} parent=39 // pred_check
          %p446 = pneg %p296
        $region50: #{tpu_custom_call.1} parent=39 // pred_check_branch
          %448 = sbr.rel (%p446) target = $region52
        $region51: #{tpu_custom_call.1} parent=39 // pred_region
          %v449 = vld [vmem:[#allocation2] sm:$0x1]
          %v450 = vld [vmem:[%s1] sm:$0xff]
          %v451 = vld [vmem:[%s1 + $0x8] sm:$0xff]
          %v452 = vld [vmem:[%s1 + $0x10] sm:$0xff]
          %v453 = vld [vmem:[%s1 + $0x18] sm:$0xff]
          %v454 = vld [vmem:[%s1 + $0x20] sm:$0xff]
          %v455 = vld [vmem:[%s1 + $0x28] sm:$0xff]
          %v456 = vld [vmem:[%s1 + $0x30] sm:$0xff]
          %v457 = vld [vmem:[%s1 + $0x38] sm:$0xff]
          %v458 = vld [vmem:[%s1 + $0x40] sm:$0xff]
          %v459 = vld [vmem:[%s1 + $0x48] sm:$0xff]
          %v460 = vld [vmem:[%s1 + $0x50] sm:$0xff]
          %v461 = vld [vmem:[%s1 + $0x58] sm:$0xff]
          %v462 = vld [vmem:[%s1 + $0x60] sm:$0xff]
          %v463 = vld [vmem:[%s1 + $0x68] sm:$0xff]
          %v464 = vld [vmem:[%s1 + $0x70] sm:$0xff]
          %v465 = vld [vmem:[%s1 + $0x78] sm:$0xff]
          %466 = vmatprep.subr.mxu0 0.0
          %467 = vmatpush1.msra.mxu0 %v465
          %468 = vmatprep.subr.mxu0 0.0
          %469 = vmatpush1.msra.mxu0 %v464
          %470 = vmatprep.subr.mxu0 0.0
          %471 = vmatpush1.msra.mxu0 %v463
          %472 = vmatprep.subr.mxu0 0.0
          %473 = vmatpush1.msra.mxu0 %v462
          %474 = vmatprep.subr.mxu0 0.0
          %475 = vmatpush1.msra.mxu0 %v461
          %476 = vmatprep.subr.mxu0 0.0
          %477 = vmatpush1.msra.mxu0 %v460
          %478 = vmatprep.subr.mxu0 0.0
          %479 = vmatpush1.msra.mxu0 %v459
          %480 = vmatprep.subr.mxu0 0.0
          %481 = vmatpush1.msra.mxu0 %v458
          %482 = vmatprep.subr.mxu0 0.0
          %483 = vmatpush1.msra.mxu0 %v457
          %484 = vmatprep.subr.mxu0 0.0
          %485 = vmatpush1.msra.mxu0 %v456
          %486 = vmatprep.subr.mxu0 0.0
          %487 = vmatpush1.msra.mxu0 %v455
          %488 = vmatprep.subr.mxu0 0.0
          %489 = vmatpush1.msra.mxu0 %v454
          %490 = vmatprep.subr.mxu0 0.0
          %491 = vmatpush1.msra.mxu0 %v453
          %492 = vmatprep.subr.mxu0 0.0
          %493 = vmatpush1.msra.mxu0 %v452
          %494 = vmatprep.subr.mxu0 0.0
          %495 = vmatpush1.msra.mxu0 %v451
          %496 = vmatprep.subr.mxu0 0.0
          %497 = vmatpush1.msra.mxu0 %v450
          %498 = vmatprep.subr.mxu0 0.0
          %499 = vmatpush2.msra.mxu0 0.0
          %500 = vmatprep.subr.mxu0 0.0
          %501 = vmatpush2.msra.mxu0 0.0
          %502 = vmatprep.subr.mxu0 0.0
          %503 = vmatpush2.msra.mxu0 0.0
          %504 = vmatprep.subr.mxu0 0.0
          %505 = vmatpush2.msra.mxu0 0.0
          %506 = vmatprep.subr.mxu0 0.0
          %507 = vmatpush2.msra.mxu0 0.0
          %508 = vmatprep.subr.mxu0 0.0
          %509 = vmatpush2.msra.mxu0 0.0
          %510 = vmatprep.subr.mxu0 0.0
          %511 = vmatpush2.msra.mxu0 0.0
          %512 = vmatprep.subr.mxu0 0.0
          %513 = vmatpush2.msra.mxu0 0.0
          %514 = vmatprep.subr.mxu0 0.0
          %515 = vmatpush2.msra.mxu0 0.0
          %516 = vmatprep.subr.mxu0 0.0
          %517 = vmatpush2.msra.mxu0 0.0
          %518 = vmatprep.subr.mxu0 0.0
          %519 = vmatpush2.msra.mxu0 0.0
          %520 = vmatprep.subr.mxu0 0.0
          %521 = vmatpush2.msra.mxu0 0.0
          %522 = vmatprep.subr.mxu0 0.0
          %523 = vmatpush2.msra.mxu0 0.0
          %524 = vmatprep.subr.mxu0 0.0
          %525 = vmatpush2.msra.mxu0 0.0
          %526 = vmatprep.subr.mxu0 0.0
          %527 = vmatpush2.msra.mxu0 0.0
          %528 = vmatprep.subr.mxu0 0.0
          %529 = vmatpush2.msra.mxu0 0.0
          %530 = vmatprep.mubr.f32.mxu0 0.0
          %531 = vmatmul.mubr.f32.gmra.mxu0 %v449
          %v532 = vpop.f32.mrf.mxu0
          %v533 = vadd.f32 0.0, %v532
          %v534 = vpop.f32.mrf.mxu0
          %535 = vdwg.mxu0
          %v536 = vld [vmem:[#allocation3] sm:$0x1]
          %537 = vmatprep.subr.mxu0 0.0
          %538 = vmatpush1.msra.mxu0 %v465
          %539 = vmatprep.subr.mxu0 0.0
          %540 = vmatpush1.msra.mxu0 %v464
          %541 = vmatprep.subr.mxu0 0.0
          %542 = vmatpush1.msra.mxu0 %v463
          %543 = vmatprep.subr.mxu0 0.0
          %544 = vmatpush1.msra.mxu0 %v462
          %545 = vmatprep.subr.mxu0 0.0
          %546 = vmatpush1.msra.mxu0 %v461
          %547 = vmatprep.subr.mxu0 0.0
          %548 = vmatpush1.msra.mxu0 %v460
          %549 = vmatprep.subr.mxu0 0.0
          %550 = vmatpush1.msra.mxu0 %v459
          %551 = vmatprep.subr.mxu0 0.0
          %552 = vmatpush1.msra.mxu0 %v458
          %553 = vmatprep.subr.mxu0 0.0
          %554 = vmatpush1.msra.mxu0 %v457
          %555 = vmatprep.subr.mxu0 0.0
          %556 = vmatpush1.msra.mxu0 %v456
          %557 = vmatprep.subr.mxu0 0.0
          %558 = vmatpush1.msra.mxu0 %v455
          %559 = vmatprep.subr.mxu0 0.0
          %560 = vmatpush1.msra.mxu0 %v454
          %561 = vmatprep.subr.mxu0 0.0
          %562 = vmatpush1.msra.mxu0 %v453
          %563 = vmatprep.subr.mxu0 0.0
          %564 = vmatpush1.msra.mxu0 %v452
          %565 = vmatprep.subr.mxu0 0.0
          %566 = vmatpush1.msra.mxu0 %v451
          %567 = vmatprep.subr.mxu0 0.0
          %568 = vmatpush1.msra.mxu0 %v450
          %569 = vmatprep.subr.mxu0 0.0
          %570 = vmatpush2.msra.mxu0 0.0
          %571 = vmatprep.subr.mxu0 0.0
          %572 = vmatpush2.msra.mxu0 0.0
          %573 = vmatprep.subr.mxu0 0.0
          %574 = vmatpush2.msra.mxu0 0.0
          %575 = vmatprep.subr.mxu0 0.0
          %576 = vmatpush2.msra.mxu0 0.0
          %577 = vmatprep.subr.mxu0 0.0
          %578 = vmatpush2.msra.mxu0 0.0
          %579 = vmatprep.subr.mxu0 0.0
          %580 = vmatpush2.msra.mxu0 0.0
          %581 = vmatprep.subr.mxu0 0.0
          %582 = vmatpush2.msra.mxu0 0.0
          %583 = vmatprep.subr.mxu0 0.0
          %584 = vmatpush2.msra.mxu0 0.0
          %585 = vmatprep.subr.mxu0 0.0
          %586 = vmatpush2.msra.mxu0 0.0
          %587 = vmatprep.subr.mxu0 0.0
          %588 = vmatpush2.msra.mxu0 0.0
          %589 = vmatprep.subr.mxu0 0.0
          %590 = vmatpush2.msra.mxu0 0.0
          %591 = vmatprep.subr.mxu0 0.0
          %592 = vmatpush2.msra.mxu0 0.0
          %593 = vmatprep.subr.mxu0 0.0
          %594 = vmatpush2.msra.mxu0 0.0
          %595 = vmatprep.subr.mxu0 0.0
          %596 = vmatpush2.msra.mxu0 0.0
          %597 = vmatprep.subr.mxu0 0.0
          %598 = vmatpush2.msra.mxu0 0.0
          %599 = vmatprep.subr.mxu0 0.0
          %600 = vmatpush2.msra.mxu0 0.0
          %601 = vmatprep.mubr.f32.mxu0 0.0
          %602 = vmatmul.mubr.f32.gmra.mxu0 %v536
          %v603 = vpop.f32.mrf.mxu0
          %v604 = vadd.f32 0.0, %v603
          %v605 = vpop.f32.mrf.mxu0
          %606 = vdwg.mxu0
          %v607 = vmul.f32 %v533, %v533
          %v608 = vsub.f32 %v604, %v607
          %v609 = vadd.f32 %v608, 1e-05
          %v610 = vrsqrt.pop %v609
          %v611 = vld [vmem:[%s2] sm:$0xff]
          %v612 = vld [vmem:[%s2 + $0x8] sm:$0xff]
          %v613 = vld [vmem:[%s2 + $0x10] sm:$0xff]
          %v614 = vld [vmem:[%s2 + $0x18] sm:$0xff]
          %vm615 = vcmask 261120
          %v617 = vsel %vm615, %v533, 0
          %619 = vmatprep.subr.mxu0 0.0
          %620 = vmatpush1.msra.mxu0 0.0
          %621 = vmatprep.subr.mxu0 0.0
          %622 = vmatpush1.msra.mxu0 0.0
          %623 = vmatprep.subr.mxu0 0.0
          %624 = vmatpush1.msra.mxu0 0.0
          %625 = vmatprep.subr.mxu0 0.0
          %626 = vmatpush1.msra.mxu0 0.0
          %627 = vmatprep.subr.mxu0 0.0
          %628 = vmatpush1.msra.mxu0 0.0
          %629 = vmatprep.subr.mxu0 0.0
          %630 = vmatpush1.msra.mxu0 0.0
          %631 = vmatprep.subr.mxu0 0.0
          %632 = vmatpush1.msra.mxu0 0.0
          %633 = vmatprep.subr.mxu0 0.0
          %634 = vmatpush1.msra.mxu0 0.0
          %635 = vmatprep.subr.mxu0 0.0
          %636 = vmatpush1.msra.mxu0 0.0
          %637 = vmatprep.subr.mxu0 0.0
          %638 = vmatpush1.msra.mxu0 0.0
          %639 = vmatprep.subr.mxu0 0.0
          %640 = vmatpush1.msra.mxu0 0.0
          %641 = vmatprep.subr.mxu0 0.0
          %642 = vmatpush1.msra.mxu0 0.0
          %643 = vmatprep.subr.mxu0 0.0
          %644 = vmatpush1.msra.mxu0 %v614
          %645 = vmatprep.subr.mxu0 0.0
          %646 = vmatpush1.msra.mxu0 %v613
          %647 = vmatprep.subr.mxu0 0.0
          %648 = vmatpush1.msra.mxu0 %v612
          %649 = vmatprep.subr.mxu0 0.0
          %650 = vmatpush1.msra.mxu0 %v611
          %651 = vmatprep.subr.mxu0 0.0
          %652 = vmatpush2.msra.mxu0 0.0
          %653 = vmatprep.subr.mxu0 0.0
          %654 = vmatpush2.msra.mxu0 0.0
          %655 = vmatprep.subr.mxu0 0.0
          %656 = vmatpush2.msra.mxu0 0.0
          %657 = vmatprep.subr.mxu0 0.0
          %658 = vmatpush2.msra.mxu0 0.0
          %659 = vmatprep.subr.mxu0 0.0
          %660 = vmatpush2.msra.mxu0 0.0
          %661 = vmatprep.subr.mxu0 0.0
          %662 = vmatpush2.msra.mxu0 0.0
          %663 = vmatprep.subr.mxu0 0.0
          %664 = vmatpush2.msra.mxu0 0.0
          %665 = vmatprep.subr.mxu0 0.0
          %666 = vmatpush2.msra.mxu0 0.0
          %667 = vmatprep.subr.mxu0 0.0
          %668 = vmatpush2.msra.mxu0 0.0
          %669 = vmatprep.subr.mxu0 0.0
          %670 = vmatpush2.msra.mxu0 0.0
          %671 = vmatprep.subr.mxu0 0.0
          %672 = vmatpush2.msra.mxu0 0.0
          %673 = vmatprep.subr.mxu0 0.0
          %674 = vmatpush2.msra.mxu0 0.0
          %675 = vmatprep.subr.mxu0 0.0
          %676 = vmatpush2.msra.mxu0 0.0
          %677 = vmatprep.subr.mxu0 0.0
          %678 = vmatpush2.msra.mxu0 0.0
          %679 = vmatprep.subr.mxu0 0.0
          %680 = vmatpush2.msra.mxu0 0.0
          %681 = vmatprep.subr.mxu0 0.0
          %682 = vmatpush2.msra.mxu0 0.0
          %683 = vmatprep.mubr.f32.mxu0 0.0
          %684 = vmatmul.mubr.f32.gmra.mxu0 %v617
          %v685 = vpop.f32.mrf.mxu0
          %v686 = vadd.f32 0.0, %v685
          %v687 = vpop.f32.mrf.mxu0
          %688 = vdwg.mxu0
          %v690 = vsel %vm615, %v610, 0
          %692 = vmatprep.subr.mxu0 0.0
          %693 = vmatpush1.msra.mxu0 0.0
          %694 = vmatprep.subr.mxu0 0.0
          %695 = vmatpush1.msra.mxu0 0.0
          %696 = vmatprep.subr.mxu0 0.0
          %697 = vmatpush1.msra.mxu0 0.0
          %698 = vmatprep.subr.mxu0 0.0
          %699 = vmatpush1.msra.mxu0 0.0
          %700 = vmatprep.subr.mxu0 0.0
          %701 = vmatpush1.msra.mxu0 0.0
          %702 = vmatprep.subr.mxu0 0.0
          %703 = vmatpush1.msra.mxu0 0.0
          %704 = vmatprep.subr.mxu0 0.0
          %705 = vmatpush1.msra.mxu0 0.0
          %706 = vmatprep.subr.mxu0 0.0
          %707 = vmatpush1.msra.mxu0 0.0
          %708 = vmatprep.subr.mxu0 0.0
          %709 = vmatpush1.msra.mxu0 0.0
          %710 = vmatprep.subr.mxu0 0.0
          %711 = vmatpush1.msra.mxu0 0.0
          %712 = vmatprep.subr.mxu0 0.0
          %713 = vmatpush1.msra.mxu0 0.0
          %714 = vmatprep.subr.mxu0 0.0
          %715 = vmatpush1.msra.mxu0 0.0
          %716 = vmatprep.subr.mxu0 0.0
          %717 = vmatpush1.msra.mxu0 %v614
          %718 = vmatprep.subr.mxu0 0.0
          %719 = vmatpush1.msra.mxu0 %v613
          %720 = vmatprep.subr.mxu0 0.0
          %721 = vmatpush1.msra.mxu0 %v612
          %722 = vmatprep.subr.mxu0 0.0
          %723 = vmatpush1.msra.mxu0 %v611
          %724 = vmatprep.subr.mxu0 0.0
          %725 = vmatpush2.msra.mxu0 0.0
          %726 = vmatprep.subr.mxu0 0.0
          %727 = vmatpush2.msra.mxu0 0.0
          %728 = vmatprep.subr.mxu0 0.0
          %729 = vmatpush2.msra.mxu0 0.0
          %730 = vmatprep.subr.mxu0 0.0
          %731 = vmatpush2.msra.mxu0 0.0
          %732 = vmatprep.subr.mxu0 0.0
          %733 = vmatpush2.msra.mxu0 0.0
          %734 = vmatprep.subr.mxu0 0.0
          %735 = vmatpush2.msra.mxu0 0.0
          %736 = vmatprep.subr.mxu0 0.0
          %737 = vmatpush2.msra.mxu0 0.0
          %738 = vmatprep.subr.mxu0 0.0
          %739 = vmatpush2.msra.mxu0 0.0
          %740 = vmatprep.subr.mxu0 0.0
          %741 = vmatpush2.msra.mxu0 0.0
          %742 = vmatprep.subr.mxu0 0.0
          %743 = vmatpush2.msra.mxu0 0.0
          %744 = vmatprep.subr.mxu0 0.0
          %745 = vmatpush2.msra.mxu0 0.0
          %746 = vmatprep.subr.mxu0 0.0
          %747 = vmatpush2.msra.mxu0 0.0
          %748 = vmatprep.subr.mxu0 0.0
          %749 = vmatpush2.msra.mxu0 0.0
          %750 = vmatprep.subr.mxu0 0.0
          %751 = vmatpush2.msra.mxu0 0.0
          %752 = vmatprep.subr.mxu0 0.0
          %753 = vmatpush2.msra.mxu0 0.0
          %754 = vmatprep.subr.mxu0 0.0
          %755 = vmatpush2.msra.mxu0 0.0
          %756 = vmatprep.mubr.f32.mxu0 0.0
          %757 = vmatmul.mubr.f32.gmra.mxu0 %v690
          %v758 = vpop.f32.mrf.mxu0
          %v759 = vadd.f32 0.0, %v758
          %v760 = vpop.f32.mrf.mxu0
          %761 = vdwg.mxu0
          %v762 = vld [vmem:[%s3] sm:$0x1]
          %v763 = vmul.f32 %v759, %v762
          %764 = vst [vmem:[%s288] sm:$0x1] %v763
          %v765 = vld [vmem:[%s4] sm:$0x1]
          %v766 = vmul.f32 %v686, %v759
          %v767 = vmul.f32 %v766, %v762
          %v768 = vsub.f32 %v765, %v767
          %769 = vst [vmem:[%s294] sm:$0x1] %v768
        $region52: #{tpu_custom_call.1} parent=39 // pred_fallthru
          _
        %s770 = sand.u32 %s159, 1
        %s771 = scalar_lea.sflag [#allocation6], %s770
        %s772 = sand.u32 %s159, 1
        %s773 = scalar_lea.vmem [#allocation7], %s772
        %s774 = sand.u32 %s185, 1
        %s775 = scalar_lea.sflag [#allocation9], %s774
        %s776 = sand.u32 %s185, 1
        %s777 = scalar_lea.vmem [#allocation8], %s776
        // Predicated region
        $region53: #{tpu_custom_call.1} parent=39 // pred_check
          %p778 = pneg %p169
        $region54: #{tpu_custom_call.1} parent=39 // pred_check_branch
          %780 = sbr.rel (%p778) target = $region56
        $region55: #{tpu_custom_call.1} parent=39 // pred_region
          %s782 = ssub.s32 16, 16
          %783 = vsyncadd %s771, %s782
          %s784 = smul.addr %s31, 16
          %s785 = scalar_lea.hbm %s5, %s784
          %s787 = sshll.u32 %s773, 4
          %s788 = int_to_ptr.vmem [resolvable:$true] %s787
          %790 = dma.vmem_to_hbm [thread:$0]  %s788, 16, %s785, %s771
        $region56: #{tpu_custom_call.1} parent=39 // pred_fallthru
          _
        // Predicated region
        $region57: #{tpu_custom_call.1} parent=39 // pred_check
          %p791 = pneg %p195
        $region58: #{tpu_custom_call.1} parent=39 // pred_check_branch
          %793 = sbr.rel (%p791) target = $region60
        $region59: #{tpu_custom_call.1} parent=39 // pred_region
          %s795 = ssub.s32 16, 16
          %796 = vsyncadd %s775, %s795
          %s797 = smul.addr %s31, 16
          %s798 = scalar_lea.hbm %s6, %s797
          %s800 = sshll.u32 %s777, 4
          %s801 = int_to_ptr.vmem [resolvable:$true] %s800
          %803 = dma.vmem_to_hbm [thread:$0]  %s801, 16, %s798, %s775
        $region60: #{tpu_custom_call.1} parent=39 // pred_fallthru
          _
      $region40: #{tpu_custom_call.1} parent=5 // pred_fallthru
        _
      %p804 = scmp.le.s32.totalorder 2, %s22
      // Predicated region
      $region61: #{tpu_custom_call.1} parent=5 // pred_check
        %p805 = pneg %p804
      $region62: #{tpu_custom_call.1} parent=5 // pred_check_branch
        %807 = sbr.rel (%p805) target = $region64
      $region63: #{tpu_custom_call.1} parent=5 // pred_region
        %s808 = ssub.s32 %s22, 2
        // Predicated region
        $region65: #{tpu_custom_call.1} parent=63 // pred_check
          %p809 = pneg %p175
        $region66: #{tpu_custom_call.1} parent=63 // pred_check_branch
          %811 = sbr.rel (%p809) target = $region68
        $region67: #{tpu_custom_call.1} parent=63 // pred_region
          %s812 = sand.u32 %s160, 1
          %s813 = scalar_lea.sflag [#allocation6], %s812
          %s814 = sand.u32 %s160, 1
          %s815 = scalar_lea.vmem [#allocation7], %s814
          %816 = dma.done %s813, 16
        $region68: #{tpu_custom_call.1} parent=63 // pred_fallthru
          _
        // Predicated region
        $region69: #{tpu_custom_call.1} parent=63 // pred_check
          %p817 = pneg %p201
        $region70: #{tpu_custom_call.1} parent=63 // pred_check_branch
          %819 = sbr.rel (%p817) target = $region72
        $region71: #{tpu_custom_call.1} parent=63 // pred_region
          %s820 = sand.u32 %s186, 1
          %s821 = scalar_lea.sflag [#allocation9], %s820
          %s822 = sand.u32 %s186, 1
          %s823 = scalar_lea.vmem [#allocation8], %s822
          %824 = dma.done %s821, 16
        $region72: #{tpu_custom_call.1} parent=63 // pred_fallthru
          _
      $region64: #{tpu_custom_call.1} parent=5 // pred_fallthru
        _
    $region6: #{tpu_custom_call.1} parent=1 // loop_footer
      %s26 = sadd.s32 1, %s22
    $region7: #{tpu_custom_call.1} parent=1 // loop_footer_branch
      %21 = sbr.rel target = $region3
    $region8: #{tpu_custom_call.1} parent=1 // loop_exit
      _
    %825 = vsyncpa [#allocation5], 1
    %s826 = scalar_lea.sflag [#allocation5], 1
    %827 = vsyncpa %s826, 1
    %828 = vsyncpa [#allocation6], 1
    %s829 = scalar_lea.sflag [#allocation6], 1
    %830 = vsyncpa %s829, 1
    %831 = vsyncpa [#allocation9], 1
    %s832 = scalar_lea.sflag [#allocation9], 1
    %833 = vsyncpa %s832, 1

</llo_original>
